<compile_context>
chip_gen: v7x
topology: tpu7x:2x2x1
jax: 0.10.0
libtpu: 0.0.40
codegen_flags: <defaults>
</compile_context>

<pallas_src>
import jax
import jax.numpy as jnp
from jax.experimental import pallas as pl
from jax.experimental.pallas import tpu as pltpu

EPS = 1e-5        # PyTorch nn.LayerNorm default eps
OUT_PAD = 128     # lane-dense packed-output width (>= 2 * num_labels)


def span_head_kernel(x_ref, sp_ref,
                     wc_ref,            # fused [W0a | Wstart] (H, H1P+OUT_PAD) bf16, LN1 affine folded
                     w0b_ref, b0_ref,   # (1, H1P) f32 (W0 row for start_logits, dense_0 bias + be1@W0a)
                     w1_ref,            # dense_1 (H1P, OUT_PAD) bf16, LN2 affine folded, zero padded rows
                     bout_ref,          # packed output bias (1, OUT_PAD) f32
                     out_ref):          # (tS, OUT_PAD) bf16 (or f32)
    x = x_ref[...].astype(jnp.float32)       # (tS, H); input may be f32 or bf16
    sp = sp_ref[...].astype(jnp.float32)     # (tS, 1)
    H = x.shape[-1]
    H1 = H + 1                               # true end_fc hidden width
    H1P = w0b_ref.shape[-1]                  # lane-padded width (multiple of 128)

    # Hoist broadcast rows once (JAX does not CSE broadcast_in_dim).
    w0b, b0 = w0b_ref[...], b0_ref[...]
    bout = bout_ref[...]

    # --- LayerNorm over H, single pass, affine folded into wc/b0/bout ---
    inv_h = 1.0 / H
    s1 = jnp.sum(x, axis=-1, keepdims=True) * inv_h
    s2 = jnp.sum(x * x, axis=-1, keepdims=True) * inv_h
    xn = (x - s1) * jax.lax.rsqrt(s2 - s1 * s1 + EPS)

    # --- fused MXU pass: [dense_0(xn part) | start_fc] in one bf16 matmul ---
    a = jnp.dot(xn.astype(jnp.bfloat16), wc_ref[...],
                preferred_element_type=jnp.float32)        # (tS, H1P + OUT_PAD)
    h_pre = a[:, :H1P] + sp * w0b + b0                     # padded lanes stay exactly 0
    ps1 = a[:, H1P:]                                       # lanes [0, L) = start logits

    h = jnp.tanh(h_pre)                                    # tanh(0)=0 on padded lanes

    # --- LayerNorm over the TRUE H+1 lanes (padded lanes of h are exactly
    #     zero, so sums over the padded row with a 1/H1 divisor are exact).
    #     The affine (g2, be2) is folded into w1/bout; the padded lanes of hn
    #     are nonzero but nulled by w1's zero padded rows. ---
    inv_h1 = 1.0 / H1
    m1 = jnp.sum(h, axis=-1, keepdims=True) * inv_h1
    m2 = jnp.sum(h * h, axis=-1, keepdims=True) * inv_h1
    hn = (h - m1) * jax.lax.rsqrt(m2 - m1 * m1 + EPS)

    # --- dense_1 (bf16 in, f32 accumulate), writes into lanes [L, 2L) ---
    ps2 = jnp.dot(hn.astype(jnp.bfloat16), w1_ref[...],
                  preferred_element_type=jnp.float32)

    out_ref[...] = (ps1 + ps2 + bout).astype(out_ref.dtype)   # one unmasked lane-dense store


def span_scope_head(seq_out, start_logits, kp, *, block_s=512,
                    out_dtype=jnp.bfloat16, vmem_limit_bytes=None):
    """seq_out: (B, S, H) f32 or bf16; start_logits: (B, S, 1).

    Returns packed logits (B, S, OUT_PAD) in `out_dtype`:
      [..., :L] = start_fc logits, [..., L:2L] = end_fc logits.

    block_s: seq tile (multiple of 16).  512 is a good default for BERT-base/
    large on v5e/v6e/v7x (see VMEM accounting in the module docstring); on
    v5e with tS >= 1024 pass vmem_limit_bytes (scoped default is only 16 MiB).
    """
    B, S, H = seq_out.shape
    out_pad = kp["bout"].shape[-1]
    assert block_s % 16 == 0

    # 16-aligned seq tile, never larger than (padded) S.
    tS = min(block_s, ((S + 15) // 16) * 16)
    n_tiles = -(-S // tS)
    # v7x has 2 TensorCores; give the "parallel" grid at least 2 steps.
    if B * n_tiles < 2 and tS > 16:
        tS = max(16, ((tS // 2 + 15) // 16) * 16)
        n_tiles = -(-S // tS)
    S_pad = n_tiles * tS
    if S_pad != S:
        pad = ((0, 0), (0, S_pad - S), (0, 0))
        seq_out = jnp.pad(seq_out, pad)
        start_logits = jnp.pad(start_logits, pad)

    act_spec = pl.BlockSpec((None, tS, H), lambda b, s: (b, s, 0))
    sp_spec = pl.BlockSpec((None, tS, 1), lambda b, s: (b, s, 0))
    out_spec = pl.BlockSpec((None, tS, out_pad), lambda b, s: (b, s, 0))

    def w_spec(arr):
        # Full-array block, constant index -> DMA'd once; single-buffered
        # (weights never change across grid steps, double-buffering them
        # would only burn VMEM).
        return pl.BlockSpec(arr.shape, lambda b, s: (0, 0),
                            pipeline_mode=pl.Buffered(1))

    order = ("wc", "w0b", "b0", "w1p", "bout")
    p_arrays = [kp[k] for k in order]

    out = pl.pallas_call(
        span_head_kernel,
        grid_spec=pl.GridSpec(
            grid=(B, n_tiles),
            in_specs=[act_spec, sp_spec] + [w_spec(p) for p in p_arrays],
            out_specs=out_spec),
        out_shape=jax.ShapeDtypeStruct((B, S_pad, out_pad), out_dtype),
        compiler_params=pltpu.CompilerParams(
            dimension_semantics=("parallel", "parallel"),
            vmem_limit_bytes=vmem_limit_bytes),
    )(seq_out, start_logits, *p_arrays)
    return out[:, :S, :] if S_pad != S else out


def make_params(key, H, L):
    """Natural (unpadded) params mirroring the module: xavier_uniform weights,
    small random biases / LayerNorm affines for test coverage."""
    H1 = H + 1  # soft_label=False -> end_fc hidden = hidden_size + 1

    def xavier(k, fan_in, fan_out):
        bound = (6.0 / (fan_in + fan_out)) ** 0.5
        return jax.random.uniform(k, (fan_in, fan_out), jnp.float32,
                                  minval=-bound, maxval=bound)

    ks = jax.random.split(key, 9)
    return {
        "ln1_g": 1.0 + 0.1 * jax.random.normal(ks[0], (H,), jnp.float32),
        "ln1_b": 0.1 * jax.random.normal(ks[1], (H,), jnp.float32),
        "w_start": xavier(ks[2], H, L),
        "b_start": 0.1 * jax.random.normal(ks[3], (L,), jnp.float32),
        "w0": xavier(ks[4], H1, H1),            # stored (in, out)
        "b0": 0.1 * jax.random.normal(ks[5], (H1,), jnp.float32),
        "ln2_g": 1.0 + 0.1 * jax.random.normal(ks[6], (H1,), jnp.float32),
        "ln2_b": 0.1 * jax.random.normal(ks[7], (H1,), jnp.float32),
        "w1": xavier(ks[8], H1, L),
        "b1": jnp.full((L,), 0.05, jnp.float32),
    }


def pack_params(p, H, L, out_pad=OUT_PAD):
    """Pad/fuse the natural params into the kernel layout.

    - H+1 is zero-padded to a 128-multiple H1P; start_fc is fused into
      dense_0's columns ([W0a | Wstart]).
    - LN1 affine folded: wc *= g1 per row, (be1 @ wc) added to b0 / bout.
    - LN2 affine folded: w1 *= g2 per row, (be2 @ w1) added to bout[L:2L].
    Both folds are exact (computed in f32 before the bf16 weight cast).
    """
    H1 = H + 1
    H1P = ((H1 + 127) // 128) * 128
    assert 2 * L <= out_pad
    NC = H1P + out_pad

    # Fused first-matmul weight: dense_0's xn-rows + start_fc columns.
    wc = jnp.zeros((H, NC), jnp.float32)
    wc = wc.at[:, :H1].set(p["w0"][:H, :])
    wc = wc.at[:, H1P:H1P + L].set(p["w_start"])
    wc = p["ln1_g"][:, None] * wc                   # fold gamma1 (pads stay 0)
    const = p["ln1_b"] @ wc                         # fold beta1, exact f32, (NC,)

    w0b = jnp.zeros((1, H1P), jnp.float32).at[0, :H1].set(p["w0"][H, :])
    b0 = jnp.zeros((1, H1P), jnp.float32).at[0, :H1].set(p["b0"])
    b0 = b0 + const[None, :H1P]

    # dense_1 with LN2 affine folded; padded rows MUST stay exactly zero.
    w1p = jnp.zeros((H1P, out_pad), jnp.float32)
    w1p = w1p.at[:H1, L:2 * L].set(p["ln2_g"][:, None] * p["w1"])

    bout = (jnp.zeros((1, out_pad), jnp.float32)
            .at[0, :L].set(p["b_start"])
            .at[0, L:2 * L].set(p["b1"] + p["ln2_b"] @ p["w1"]))
    bout = bout + const[None, H1P:]

    # Padded-lane exactness invariants (see kernel LN2 comment).
    assert jnp.all(w0b[0, H1:] == 0.0) and jnp.all(b0[0, H1:] == 0.0)
    assert jnp.all(wc[:, H1:H1P] == 0.0)
    assert jnp.all(w1p[H1:, :] == 0.0)

    return {
        "wc": wc.astype(jnp.bfloat16),
        "w0b": w0b, "b0": b0,
        "w1p": w1p.astype(jnp.bfloat16),
        "bout": bout,
    }


def reference(seq_out, start_logits, p):
    """Pure-f32 reference with the natural (unfolded, unpadded) module math."""
    def ln(x, g, b):
        mu = jnp.mean(x, -1, keepdims=True)
        var = jnp.mean((x - mu) ** 2, -1, keepdims=True)
        return (x - mu) * jax.lax.rsqrt(var + EPS) * g + b

    xn = ln(seq_out, p["ln1_g"], p["ln1_b"])
    ps1 = xn @ p["w_start"] + p["b_start"]
    cat = jnp.concatenate([xn, start_logits], axis=-1)
    h = jnp.tanh(cat @ p["w0"] + p["b0"])
    hn = ln(h, p["ln2_g"], p["ln2_b"])
    ps2 = hn @ p["w1"] + p["b1"]
    return ps1, ps2


if __name__ == "__main__":
    B, S, H, L, VOCAB = 2, 128, 64, 1, 97   # num_labels=1, soft_label=False

    key = jax.random.PRNGKey(0)
    k_emb, k_ids, k_sp, k_par = jax.random.split(key, 4)

    # Stand-in for the BERT encoder output (see TODO(synk) above).
    input_ids = jax.random.randint(k_ids, (B, S), 0, VOCAB)
    emb_table = jax.random.normal(k_emb, (VOCAB, H), jnp.float32) * 0.02
    sequence_output = emb_table[input_ids]                       # (B, S, H)

    # start_point path: start_logits = start_point[..., None].float()
    start_point = jax.random.randint(k_sp, (B, S), 0, 2)
    start_logits = start_point[..., None].astype(jnp.float32)    # (B, S, 1)

    params = make_params(k_par, H, L)
    kparams = pack_params(params, H, L)

    packed = span_scope_head(sequence_output, start_logits, kparams, block_s=64)
    jax.block_until_ready(packed)
    packed = packed.astype(jnp.float32)
    ps1 = packed[..., :L]
    ps2 = packed[..., L:2 * L]

    r1, r2 = reference(sequence_output, start_logits, params)
    # Tolerance covers bf16 MXU inputs (vs the f32 reference matmuls) plus the
    # bf16 packed-output quantization; logits are O(1), so 5e-2 is ample.
    assert jnp.allclose(ps1, r1, rtol=5e-2, atol=5e-2), float(jnp.max(jnp.abs(ps1 - r1)))
    assert jnp.allclose(ps2, r2, rtol=5e-2, atol=5e-2), float(jnp.max(jnp.abs(ps2 - r2)))

    print("KERNEL_OK")
</pallas_src>

<mosaic_0001>
module attributes {stable_mosaic.version = 11 : i64} {
  func.func @span_head_kernel(%arg0: i32, %arg1: i32, %arg2: memref<1x64x64xf32, #tpu.memory_space<vmem>>, %arg3: memref<1x64x1xf32, #tpu.memory_space<vmem>>, %arg4: memref<64x256xbf16, #tpu.memory_space<vmem>>, %arg5: memref<1x128xf32, #tpu.memory_space<vmem>>, %arg6: memref<1x128xf32, #tpu.memory_space<vmem>>, %arg7: memref<128x128xbf16, #tpu.memory_space<vmem>>, %arg8: memref<1x128xf32, #tpu.memory_space<vmem>>, %arg9: memref<1x64x128xbf16, #tpu.memory_space<vmem>>) attributes {dimension_semantics = [#tpu.dimension_semantics<parallel>, #tpu.dimension_semantics<parallel>], iteration_bounds = array<i64: 2, 2>, scalar_prefetch = 0 : i64, scratch_operands = 0 : i64, tpu.core_type = #tpu.core_type<tc>, window_params = [{transform_indices = @transform_0, window_bounds = array<i64: 1, 64, 64>}, {transform_indices = @transform_1, window_bounds = array<i64: 1, 64, 1>}, {pipeline_mode = #tpu.pipeline_mode<synchronous>, transform_indices = @transform_2, window_bounds = array<i64: 64, 256>}, {pipeline_mode = #tpu.pipeline_mode<synchronous>, transform_indices = @transform_3, window_bounds = array<i64: 1, 128>}, {pipeline_mode = #tpu.pipeline_mode<synchronous>, transform_indices = @transform_4, window_bounds = array<i64: 1, 128>}, {pipeline_mode = #tpu.pipeline_mode<synchronous>, transform_indices = @transform_5, window_bounds = array<i64: 128, 128>}, {pipeline_mode = #tpu.pipeline_mode<synchronous>, transform_indices = @transform_6, window_bounds = array<i64: 1, 128>}, {transform_indices = @transform_7, window_bounds = array<i64: 1, 64, 128>}]} {
    %c0 = arith.constant 0 : index
    %c0_0 = arith.constant 0 : index
    %c0_1 = arith.constant 0 : index
    %0 = vector.load %arg2[%c0, %c0_0, %c0_1] : memref<1x64x64xf32, #tpu.memory_space<vmem>>, vector<1x64x64xf32>
    %1 = vector.shape_cast %0 : vector<1x64x64xf32> to vector<64x64xf32>
    %c0_2 = arith.constant 0 : index
    %c0_3 = arith.constant 0 : index
    %c0_4 = arith.constant 0 : index
    %2 = vector.load %arg3[%c0_2, %c0_3, %c0_4] : memref<1x64x1xf32, #tpu.memory_space<vmem>>, vector<1x64x1xf32>
    %3 = vector.shape_cast %2 : vector<1x64x1xf32> to vector<64x1xf32>
    %c0_5 = arith.constant 0 : index
    %c0_6 = arith.constant 0 : index
    %4 = vector.load %arg5[%c0_5, %c0_6] : memref<1x128xf32, #tpu.memory_space<vmem>>, vector<1x128xf32>
    %c0_7 = arith.constant 0 : index
    %c0_8 = arith.constant 0 : index
    %5 = vector.load %arg6[%c0_7, %c0_8] : memref<1x128xf32, #tpu.memory_space<vmem>>, vector<1x128xf32>
    %c0_9 = arith.constant 0 : index
    %c0_10 = arith.constant 0 : index
    %6 = vector.load %arg8[%c0_9, %c0_10] : memref<1x128xf32, #tpu.memory_space<vmem>>, vector<1x128xf32>
    %cst = arith.constant dense<0.000000e+00> : vector<64xf32>
    %7 = vector.multi_reduction <add>, %1, %cst [1] : vector<64x64xf32> to vector<64xf32>
    %8 = vector.shape_cast %7 : vector<64xf32> to vector<64x1xf32>
    %cst_11 = arith.constant 1.562500e-02 : f32
    %9 = vector.broadcast %cst_11 : f32 to vector<64x1xf32>
    %10 = arith.mulf %8, %9 : vector<64x1xf32>
    %11 = arith.mulf %1, %1 : vector<64x64xf32>
    %cst_12 = arith.constant dense<0.000000e+00> : vector<64xf32>
    %12 = vector.multi_reduction <add>, %11, %cst_12 [1] : vector<64x64xf32> to vector<64xf32>
    %13 = vector.shape_cast %12 : vector<64xf32> to vector<64x1xf32>
    %cst_13 = arith.constant 1.562500e-02 : f32
    %14 = vector.broadcast %cst_13 : f32 to vector<64x1xf32>
    %15 = arith.mulf %13, %14 : vector<64x1xf32>
    %16 = vector.broadcast %10 : vector<64x1xf32> to vector<64x64xf32>
    %17 = arith.subf %1, %16 : vector<64x64xf32>
    %18 = arith.mulf %10, %10 : vector<64x1xf32>
    %19 = arith.subf %15, %18 : vector<64x1xf32>
    %cst_14 = arith.constant 9.99999974E-6 : f32
    %20 = vector.broadcast %cst_14 : f32 to vector<64x1xf32>
    %21 = arith.addf %19, %20 : vector<64x1xf32>
    %22 = math.rsqrt %21 : vector<64x1xf32>
    %23 = vector.broadcast %22 : vector<64x1xf32> to vector<64x64xf32>
    %24 = arith.mulf %17, %23 : vector<64x64xf32>
    %25 = arith.truncf %24 : vector<64x64xf32> to vector<64x64xbf16>
    %c0_15 = arith.constant 0 : index
    %c0_16 = arith.constant 0 : index
    %26 = vector.load %arg4[%c0_15, %c0_16] : memref<64x256xbf16, #tpu.memory_space<vmem>>, vector<64x256xbf16>
    %cst_17 = arith.constant dense<0.000000e+00> : vector<64x256xf32>
    %27 = tpu.matmul %25, %26, %cst_17 {dimension_numbers = #tpu.dot_dimension_numbers<[1], [0], [0], [1], [0, 0, 1, 1], [], []>} : vector<64x64xbf16>, vector<64x256xbf16>, vector<64x256xf32> -> vector<64x256xf32>
    %28 = vector.extract_strided_slice %27 {offsets = [0, 0], sizes = [64, 128], strides = [1, 1]} : vector<64x256xf32> to vector<64x128xf32>
    %29 = vector.broadcast %3 : vector<64x1xf32> to vector<64x128xf32>
    %30 = vector.broadcast %4 : vector<1x128xf32> to vector<64x128xf32>
    %31 = arith.mulf %29, %30 : vector<64x128xf32>
    %32 = arith.addf %28, %31 : vector<64x128xf32>
    %33 = vector.broadcast %5 : vector<1x128xf32> to vector<64x128xf32>
    %34 = arith.addf %32, %33 : vector<64x128xf32>
    %35 = vector.extract_strided_slice %27 {offsets = [0, 128], sizes = [64, 128], strides = [1, 1]} : vector<64x256xf32> to vector<64x128xf32>
    %36 = math.tanh %34 : vector<64x128xf32>
    %cst_18 = arith.constant dense<0.000000e+00> : vector<64xf32>
    %37 = vector.multi_reduction <add>, %36, %cst_18 [1] : vector<64x128xf32> to vector<64xf32>
    %38 = vector.shape_cast %37 : vector<64xf32> to vector<64x1xf32>
    %cst_19 = arith.constant 0.0153846154 : f32
    %39 = vector.broadcast %cst_19 : f32 to vector<64x1xf32>
    %40 = arith.mulf %38, %39 : vector<64x1xf32>
    %41 = arith.mulf %36, %36 : vector<64x128xf32>
    %cst_20 = arith.constant dense<0.000000e+00> : vector<64xf32>
    %42 = vector.multi_reduction <add>, %41, %cst_20 [1] : vector<64x128xf32> to vector<64xf32>
    %43 = vector.shape_cast %42 : vector<64xf32> to vector<64x1xf32>
    %cst_21 = arith.constant 0.0153846154 : f32
    %44 = vector.broadcast %cst_21 : f32 to vector<64x1xf32>
    %45 = arith.mulf %43, %44 : vector<64x1xf32>
    %46 = vector.broadcast %40 : vector<64x1xf32> to vector<64x128xf32>
    %47 = arith.subf %36, %46 : vector<64x128xf32>
    %48 = arith.mulf %40, %40 : vector<64x1xf32>
    %49 = arith.subf %45, %48 : vector<64x1xf32>
    %cst_22 = arith.constant 9.99999974E-6 : f32
    %50 = vector.broadcast %cst_22 : f32 to vector<64x1xf32>
    %51 = arith.addf %49, %50 : vector<64x1xf32>
    %52 = math.rsqrt %51 : vector<64x1xf32>
    %53 = vector.broadcast %52 : vector<64x1xf32> to vector<64x128xf32>
    %54 = arith.mulf %47, %53 : vector<64x128xf32>
    %55 = arith.truncf %54 : vector<64x128xf32> to vector<64x128xbf16>
    %c0_23 = arith.constant 0 : index
    %c0_24 = arith.constant 0 : index
    %56 = vector.load %arg7[%c0_23, %c0_24] : memref<128x128xbf16, #tpu.memory_space<vmem>>, vector<128x128xbf16>
    %cst_25 = arith.constant dense<0.000000e+00> : vector<64x128xf32>
    %57 = tpu.matmul %55, %56, %cst_25 {dimension_numbers = #tpu.dot_dimension_numbers<[1], [0], [0], [1], [0, 0, 1, 1], [], []>} : vector<64x128xbf16>, vector<128x128xbf16>, vector<64x128xf32> -> vector<64x128xf32>
    %58 = arith.addf %35, %57 : vector<64x128xf32>
    %59 = vector.broadcast %6 : vector<1x128xf32> to vector<64x128xf32>
    %60 = arith.addf %58, %59 : vector<64x128xf32>
    %61 = arith.truncf %60 : vector<64x128xf32> to vector<64x128xbf16>
    %c0_26 = arith.constant 0 : index
    %c0_27 = arith.constant 0 : index
    %c0_28 = arith.constant 0 : index
    %62 = vector.load %arg9[%c0_26, %c0_27, %c0_28] : memref<1x64x128xbf16, #tpu.memory_space<vmem>>, vector<1x64x128xbf16>
    %63 = vector.shape_cast %62 : vector<1x64x128xbf16> to vector<64x128xbf16>
    %64 = vector.shape_cast %61 : vector<64x128xbf16> to vector<1x64x128xbf16>
    tpu.vector_store %arg9[%c0_26, %c0_27, %c0_28], %64 {strides = array<i32>} : memref<1x64x128xbf16, #tpu.memory_space<vmem>>, vector<1x64x128xbf16>,
    return
  }
  func.func @transform_0(%arg0: i32, %arg1: i32) -> (i32, i32, i32) {
    %c0_i32 = arith.constant 0 : i32
    %c0_i32_0 = arith.constant 0 : i32
    return %arg0, %arg1, %c0_i32 : i32, i32, i32
  }
  func.func @transform_1(%arg0: i32, %arg1: i32) -> (i32, i32, i32) {
    %c0_i32 = arith.constant 0 : i32
    %c0_i32_0 = arith.constant 0 : i32
    return %arg0, %arg1, %c0_i32 : i32, i32, i32
  }
  func.func @transform_2(%arg0: i32, %arg1: i32) -> (i32, i32) {
    %c0_i32 = arith.constant 0 : i32
    %c0_i32_0 = arith.constant 0 : i32
    %c0_i32_1 = arith.constant 0 : i32
    return %c0_i32, %c0_i32_0 : i32, i32
  }
  func.func @transform_3(%arg0: i32, %arg1: i32) -> (i32, i32) {
    %c0_i32 = arith.constant 0 : i32
    %c0_i32_0 = arith.constant 0 : i32
    %c0_i32_1 = arith.constant 0 : i32
    return %c0_i32, %c0_i32_0 : i32, i32
  }
  func.func @transform_4(%arg0: i32, %arg1: i32) -> (i32, i32) {
    %c0_i32 = arith.constant 0 : i32
    %c0_i32_0 = arith.constant 0 : i32
    %c0_i32_1 = arith.constant 0 : i32
    return %c0_i32, %c0_i32_0 : i32, i32
  }
  func.func @transform_5(%arg0: i32, %arg1: i32) -> (i32, i32) {
    %c0_i32 = arith.constant 0 : i32
    %c0_i32_0 = arith.constant 0 : i32
    %c0_i32_1 = arith.constant 0 : i32
    return %c0_i32, %c0_i32_0 : i32, i32
  }
  func.func @transform_6(%arg0: i32, %arg1: i32) -> (i32, i32) {
    %c0_i32 = arith.constant 0 : i32
    %c0_i32_0 = arith.constant 0 : i32
    %c0_i32_1 = arith.constant 0 : i32
    return %c0_i32, %c0_i32_0 : i32, i32
  }
  func.func @transform_7(%arg0: i32, %arg1: i32) -> (i32, i32, i32) {
    %c0_i32 = arith.constant 0 : i32
    %c0_i32_0 = arith.constant 0 : i32
    return %arg0, %arg1, %c0_i32 : i32, i32, i32
  }
}

</mosaic_0001>

<llo_original>
// kernel: tpu_custom_call.1
$region0: #{tpu_custom_call.1}
  #allocation0 [shape = 'u32[]', space=smem, size = 0x4, offset = 0x4, fixed_abs, tag = 'smem constant byte address 0x4 - core index']
  #allocation1 [shape = 'u32[144,128]{1,0:T(1,128)}', space=vmem, size = 0x12000, scoped, tag = 'internal scratch']
  %s0 = inlined_call_operand.vmem [shape: f32[2,128,64], index: 0, kind: input, shape index: {}]
  %s1 = inlined_call_operand.vmem [shape: f32[2,128,1], index: 1, kind: input, shape index: {}]
  %s2 = inlined_call_operand.vmem [shape: bf16[64,256], index: 2, kind: input, shape index: {}]
  %s3 = inlined_call_operand.vmem [shape: f32[1,128], index: 3, kind: input, shape index: {}]
  %s4 = inlined_call_operand.vmem [shape: f32[1,128], index: 4, kind: input, shape index: {}]
  %s5 = inlined_call_operand.vmem [shape: bf16[128,128], index: 5, kind: input, shape index: {}]
  %s6 = inlined_call_operand.vmem [shape: f32[1,128], index: 6, kind: input, shape index: {}]
  %s7 = inlined_call_operand.hbm [shape: bf16[2,128,128], index: 7, kind: output, shape index: {}]
  %s8 = sld [smem:[#allocation0]]
  $region61: #{tpu_custom_call.1} parent=0
    _
  %s10 = ssub.s32 1, %s8
  %s11 = scalar_select 0, %s10, %s8
  $region1: #{tpu_custom_call.1} parent=0
    #allocation2 [shape = 'u8[32768]{0}', space=vmem, size = 0x8000, scoped, tag = 'output window, operand 0']
    #allocation3 [shape = 's32[2]{0}', space=sflag, size = 0x8, scoped, tag = 'scoped memory for tpu_custom_call.1']
    %12 = vsyncpa [#allocation3], 0
    %s13 = scalar_lea.sflag [#allocation3], 1
    %14 = vsyncpa %s13, 0
    loop: start=0, step=1, limit=6
    $region2: #{tpu_custom_call.1} parent=1 // loop_pre_header
      _
    $region3: #{tpu_custom_call.1} parent=1 // loop_header
      %s16 = sphi 0, %s20
      %p17 = scmp.ge.s32.totalorder %s16, 6
      %s23 = sphi 0, %s35
      %s24 = sphi 0, %s31
      %s25 = sphi 0, %s23
      %s26 = sphi 0, %s24
      %s27 = sphi 0, %s25
      %s28 = sphi 0, %s26
      %s40 = sphi 0, %s42
      %s43 = sphi 0, %s40
      %s44 = sphi 0, %s43
      %s60 = sphi 0, %s44
      %s68 = sphi 0, %s70
      %s71 = sphi 0, %s68
      %s72 = sphi 0, %s71
      %s88 = sphi 0, %s72
      %s92 = sphi 0, %s92
      %s94 = sphi 0, %s92
      %s95 = sphi 0, %s94
      %s109 = sphi 0, %s95
      %s113 = sphi 0, %s113
      %s115 = sphi 0, %s113
      %s116 = sphi 0, %s115
      %s130 = sphi 0, %s116
      %s134 = sphi 0, %s134
      %s136 = sphi 0, %s134
      %s137 = sphi 0, %s136
      %s151 = sphi 0, %s137
      %s155 = sphi 0, %s155
      %s157 = sphi 0, %s155
      %s158 = sphi 0, %s157
      %s172 = sphi 0, %s158
      %s176 = sphi 0, %s176
      %s178 = sphi 0, %s176
      %s179 = sphi 0, %s178
      %s193 = sphi 0, %s179
      %s201 = sphi 0, %s203
      %s204 = sphi 0, %s201
      %s205 = sphi 0, %s204
      %s221 = sphi 0, %s205
    $region4: #{tpu_custom_call.1} parent=1 // loop_header_branch
      %19 = sbr.rel (%p17) target = $region8
    $region5: #{tpu_custom_call.1} parent=1 // loop_body
      %s21 = ssub.s32 %s16, 1
      %s22 = ssub.s32 %s16, 2
      %s29 = sadd.s32 1, %s24
      %p30 = scmp.ge.s32.totalorder %s29, 2
      %s31 = scalar_select %p30, 0, %s29
      %s32 = sadd.s32 1, %s23
      %s33 = scalar_select %p30, %s32, %s23
      %p34 = scmp.ge.s32.totalorder %s33, 2
      %s35 = scalar_select %p34, 0, %s33
      %s36 = ssub.s32 %s23, %s35
      %s37 = ssub.s32 %s24, %s31
      %s38 = sor.u32 %s36, %s37
      %p39 = scmp.eq.s32.totalorder %s38, 0
      %s41 = sadd.s32 %s40, 1
      %s42 = scalar_select %p39, %s40, %s41
      %p45 = pneg %p39
      %p46 = scmp.eq.s32.totalorder %s16, 3
      %p47 = por %p45, %p46
      %p48 = scmp.ne.s32.totalorder %s40, %s43
      %p49 = scmp.eq.s32.totalorder %s16, 0
      %p50 = por %p48, %p49
      %p51 = scmp.ne.s32.totalorder %s40, %s43
      %p52 = scmp.eq.s32.totalorder %s21, 3
      %p53 = por %p51, %p52
      %p54 = scmp.ne.s32.totalorder %s43, %s44
      %p55 = scmp.eq.s32.totalorder %s21, 0
      %p56 = por %p54, %p55
      %p57 = scmp.ne.s32.totalorder %s43, %s44
      %p58 = scmp.eq.s32.totalorder %s22, 3
      %p59 = por %p57, %p58
      %p61 = scmp.ne.s32.totalorder %s44, %s60
      %p62 = scmp.eq.s32.totalorder %s22, 0
      %p63 = por %p61, %p62
      %s64 = ssub.s32 %s23, %s35
      %s65 = ssub.s32 %s24, %s31
      %s66 = sor.u32 %s64, %s65
      %p67 = scmp.eq.s32.totalorder %s66, 0
      %s69 = sadd.s32 %s68, 1
      %s70 = scalar_select %p67, %s68, %s69
      %p73 = pneg %p67
      %p74 = scmp.eq.s32.totalorder %s16, 3
      %p75 = por %p73, %p74
      %p76 = scmp.ne.s32.totalorder %s68, %s71
      %p77 = scmp.eq.s32.totalorder %s16, 0
      %p78 = por %p76, %p77
      %p79 = scmp.ne.s32.totalorder %s68, %s71
      %p80 = scmp.eq.s32.totalorder %s21, 3
      %p81 = por %p79, %p80
      %p82 = scmp.ne.s32.totalorder %s71, %s72
      %p83 = scmp.eq.s32.totalorder %s21, 0
      %p84 = por %p82, %p83
      %p85 = scmp.ne.s32.totalorder %s71, %s72
      %p86 = scmp.eq.s32.totalorder %s22, 3
      %p87 = por %p85, %p86
      %p89 = scmp.ne.s32.totalorder %s72, %s88
      %p90 = scmp.eq.s32.totalorder %s22, 0
      %p91 = por %p89, %p90
      %s93 = sadd.s32 %s92, 1
      %p96 = scmp.eq.s32.totalorder %s16, 3
      %p97 = scmp.ne.s32.totalorder %s92, %s94
      %p98 = scmp.eq.s32.totalorder %s16, 0
      %p99 = por %p97, %p98
      %p100 = scmp.ne.s32.totalorder %s92, %s94
      %p101 = scmp.eq.s32.totalorder %s21, 3
      %p102 = por %p100, %p101
      %p103 = scmp.ne.s32.totalorder %s94, %s95
      %p104 = scmp.eq.s32.totalorder %s21, 0
      %p105 = por %p103, %p104
      %p106 = scmp.ne.s32.totalorder %s94, %s95
      %p107 = scmp.eq.s32.totalorder %s22, 3
      %p108 = por %p106, %p107
      %p110 = scmp.ne.s32.totalorder %s95, %s109
      %p111 = scmp.eq.s32.totalorder %s22, 0
      %p112 = por %p110, %p111
      %s114 = sadd.s32 %s113, 1
      %p117 = scmp.eq.s32.totalorder %s16, 3
      %p118 = scmp.ne.s32.totalorder %s113, %s115
      %p119 = scmp.eq.s32.totalorder %s16, 0
      %p120 = por %p118, %p119
      %p121 = scmp.ne.s32.totalorder %s113, %s115
      %p122 = scmp.eq.s32.totalorder %s21, 3
      %p123 = por %p121, %p122
      %p124 = scmp.ne.s32.totalorder %s115, %s116
      %p125 = scmp.eq.s32.totalorder %s21, 0
      %p126 = por %p124, %p125
      %p127 = scmp.ne.s32.totalorder %s115, %s116
      %p128 = scmp.eq.s32.totalorder %s22, 3
      %p129 = por %p127, %p128
      %p131 = scmp.ne.s32.totalorder %s116, %s130
      %p132 = scmp.eq.s32.totalorder %s22, 0
      %p133 = por %p131, %p132
      %s135 = sadd.s32 %s134, 1
      %p138 = scmp.eq.s32.totalorder %s16, 3
      %p139 = scmp.ne.s32.totalorder %s134, %s136
      %p140 = scmp.eq.s32.totalorder %s16, 0
      %p141 = por %p139, %p140
      %p142 = scmp.ne.s32.totalorder %s134, %s136
      %p143 = scmp.eq.s32.totalorder %s21, 3
      %p144 = por %p142, %p143
      %p145 = scmp.ne.s32.totalorder %s136, %s137
      %p146 = scmp.eq.s32.totalorder %s21, 0
      %p147 = por %p145, %p146
      %p148 = scmp.ne.s32.totalorder %s136, %s137
      %p149 = scmp.eq.s32.totalorder %s22, 3
      %p150 = por %p148, %p149
      %p152 = scmp.ne.s32.totalorder %s137, %s151
      %p153 = scmp.eq.s32.totalorder %s22, 0
      %p154 = por %p152, %p153
      %s156 = sadd.s32 %s155, 1
      %p159 = scmp.eq.s32.totalorder %s16, 3
      %p160 = scmp.ne.s32.totalorder %s155, %s157
      %p161 = scmp.eq.s32.totalorder %s16, 0
      %p162 = por %p160, %p161
      %p163 = scmp.ne.s32.totalorder %s155, %s157
      %p164 = scmp.eq.s32.totalorder %s21, 3
      %p165 = por %p163, %p164
      %p166 = scmp.ne.s32.totalorder %s157, %s158
      %p167 = scmp.eq.s32.totalorder %s21, 0
      %p168 = por %p166, %p167
      %p169 = scmp.ne.s32.totalorder %s157, %s158
      %p170 = scmp.eq.s32.totalorder %s22, 3
      %p171 = por %p169, %p170
      %p173 = scmp.ne.s32.totalorder %s158, %s172
      %p174 = scmp.eq.s32.totalorder %s22, 0
      %p175 = por %p173, %p174
      %s177 = sadd.s32 %s176, 1
      %p180 = scmp.eq.s32.totalorder %s16, 3
      %p181 = scmp.ne.s32.totalorder %s176, %s178
      %p182 = scmp.eq.s32.totalorder %s16, 0
      %p183 = por %p181, %p182
      %p184 = scmp.ne.s32.totalorder %s176, %s178
      %p185 = scmp.eq.s32.totalorder %s21, 3
      %p186 = por %p184, %p185
      %p187 = scmp.ne.s32.totalorder %s178, %s179
      %p188 = scmp.eq.s32.totalorder %s21, 0
      %p189 = por %p187, %p188
      %p190 = scmp.ne.s32.totalorder %s178, %s179
      %p191 = scmp.eq.s32.totalorder %s22, 3
      %p192 = por %p190, %p191
      %p194 = scmp.ne.s32.totalorder %s179, %s193
      %p195 = scmp.eq.s32.totalorder %s22, 0
      %p196 = por %p194, %p195
      %s197 = ssub.s32 %s23, %s35
      %s198 = ssub.s32 %s24, %s31
      %s199 = sor.u32 %s197, %s198
      %p200 = scmp.eq.s32.totalorder %s199, 0
      %s202 = sadd.s32 %s201, 1
      %s203 = scalar_select %p200, %s201, %s202
      %p206 = pneg %p200
      %p207 = scmp.eq.s32.totalorder %s16, 3
      %p208 = por %p206, %p207
      %p209 = scmp.ne.s32.totalorder %s201, %s204
      %p210 = scmp.eq.s32.totalorder %s16, 0
      %p211 = por %p209, %p210
      %p212 = scmp.ne.s32.totalorder %s201, %s204
      %p213 = scmp.eq.s32.totalorder %s21, 3
      %p214 = por %p212, %p213
      %p215 = scmp.ne.s32.totalorder %s204, %s205
      %p216 = scmp.eq.s32.totalorder %s21, 0
      %p217 = por %p215, %p216
      %p218 = scmp.ne.s32.totalorder %s204, %s205
      %p219 = scmp.eq.s32.totalorder %s22, 3
      %p220 = por %p218, %p219
      %p222 = scmp.ne.s32.totalorder %s205, %s221
      %p223 = scmp.eq.s32.totalorder %s22, 0
      %p224 = por %p222, %p223
      %p225 = scmp.le.s32.totalorder 1, %s16
      %p226 = scmp.lt.s32.totalorder %s16, 5
      %p227 = pnand %p225, %p226
      %p228 = pneg %p227
      // Predicated region
      $region9: #{tpu_custom_call.1} parent=5 // pred_check
        _
      $region10: #{tpu_custom_call.1} parent=5 // pred_check_branch
        %230 = sbr.rel (%p227) target = $region12
      $region11: #{tpu_custom_call.1} parent=5 // pred_region
        %s231 = ssub.s32 %s16, 1
        // Predicated region
        $region13: #{tpu_custom_call.1} parent=11 // pred_check
          %p232 = pneg %p105
        $region14: #{tpu_custom_call.1} parent=11 // pred_check_branch
          %234 = sbr.rel (%p232) target = $region16
        $region15: #{tpu_custom_call.1} parent=11 // pred_region
          _
        $region16: #{tpu_custom_call.1} parent=11 // pred_fallthru
          _
        // Predicated region
        $region17: #{tpu_custom_call.1} parent=11 // pred_check
          %p235 = pneg %p126
        $region18: #{tpu_custom_call.1} parent=11 // pred_check_branch
          %237 = sbr.rel (%p235) target = $region20
        $region19: #{tpu_custom_call.1} parent=11 // pred_region
          _
        $region20: #{tpu_custom_call.1} parent=11 // pred_fallthru
          _
        // Predicated region
        $region21: #{tpu_custom_call.1} parent=11 // pred_check
          %p238 = pneg %p147
        $region22: #{tpu_custom_call.1} parent=11 // pred_check_branch
          %240 = sbr.rel (%p238) target = $region24
        $region23: #{tpu_custom_call.1} parent=11 // pred_region
          _
        $region24: #{tpu_custom_call.1} parent=11 // pred_fallthru
          _
        // Predicated region
        $region25: #{tpu_custom_call.1} parent=11 // pred_check
          %p241 = pneg %p168
        $region26: #{tpu_custom_call.1} parent=11 // pred_check_branch
          %243 = sbr.rel (%p241) target = $region28
        $region27: #{tpu_custom_call.1} parent=11 // pred_region
          _
        $region28: #{tpu_custom_call.1} parent=11 // pred_fallthru
          _
        // Predicated region
        $region29: #{tpu_custom_call.1} parent=11 // pred_check
          %p244 = pneg %p189
        $region30: #{tpu_custom_call.1} parent=11 // pred_check_branch
          %246 = sbr.rel (%p244) target = $region32
        $region31: #{tpu_custom_call.1} parent=11 // pred_region
          _
        $region32: #{tpu_custom_call.1} parent=11 // pred_fallthru
          _
      $region12: #{tpu_custom_call.1} parent=5 // pred_fallthru
        _
      %p247 = scmp.lt.s32.totalorder %s16, 4
      // Predicated region
      $region33: #{tpu_custom_call.1} parent=5 // pred_check
        %p248 = pneg %p247
      $region34: #{tpu_custom_call.1} parent=5 // pred_check_branch
        %250 = sbr.rel (%p248) target = $region36
      $region35: #{tpu_custom_call.1} parent=5 // pred_region
        // Predicated region
        $region37: #{tpu_custom_call.1} parent=35 // pred_check
          %p251 = pneg %p50
        $region38: #{tpu_custom_call.1} parent=35 // pred_check_branch
          %253 = sbr.rel (%p251) target = $region40
        $region39: #{tpu_custom_call.1} parent=35 // pred_region
          %s254 = smul.u32 8, %s24
          %p255 = scmp.lt.s32.totalorder %s23, 1
          %s256 = scalar_select %p255, %s23, 1
          %p257 = scmp.lt.s32.totalorder %s254, 15
          %s258 = scalar_select %p257, %s254, 15
          %s259 = smul.addr %s256, 16
          %s260 = sadd.s32 %s258, %s259
          %s261 = smul.addr %s260, 8
          %s262 = scalar_lea.vmem %s0, %s261
          %s263 = smul.u32 8, %s24
        $region40: #{tpu_custom_call.1} parent=35 // pred_fallthru
          _
        // Predicated region
        $region41: #{tpu_custom_call.1} parent=35 // pred_check
          %p264 = pneg %p78
        $region42: #{tpu_custom_call.1} parent=35 // pred_check_branch
          %266 = sbr.rel (%p264) target = $region44
        $region43: #{tpu_custom_call.1} parent=35 // pred_region
          %s267 = smul.u32 8, %s24
          %p268 = scmp.lt.s32.totalorder %s23, 1
          %s269 = scalar_select %p268, %s23, 1
          %p270 = scmp.lt.s32.totalorder %s267, 15
          %s271 = scalar_select %p270, %s267, 15
          %s272 = smul.addr %s269, 16
          %s273 = sadd.s32 %s271, %s272
          %s274 = smul.addr %s273, 8
          %s275 = scalar_lea.vmem %s1, %s274
          %s276 = smul.u32 8, %s24
        $region44: #{tpu_custom_call.1} parent=35 // pred_fallthru
          _
      $region36: #{tpu_custom_call.1} parent=5 // pred_fallthru
        _
      %p277 = scmp.le.s32.totalorder 1, %s16
      %p278 = scmp.lt.s32.totalorder %s16, 5
      %p279 = pnand %p277, %p278
      %p280 = pneg %p279
      // Predicated region
      $region45: #{tpu_custom_call.1} parent=5 // pred_check
        _
      $region46: #{tpu_custom_call.1} parent=5 // pred_check_branch
        %282 = sbr.rel (%p279) target = $region48
      $region47: #{tpu_custom_call.1} parent=5 // pred_region
        %s283 = ssub.s32 %s16, 1
        %s284 = smul.u32 8, %s26
        %p285 = scmp.lt.s32.totalorder %s25, 1
        %s286 = scalar_select %p285, %s25, 1
        %p287 = scmp.lt.s32.totalorder %s284, 15
        %s288 = scalar_select %p287, %s284, 15
        %s289 = smul.addr %s286, 16
        %s290 = sadd.s32 %s288, %s289
        %s291 = smul.addr %s290, 8
        %s292 = scalar_lea.vmem %s0, %s291
        %p293 = pneg %p56
        %p294 = pneg %p53
        %s295 = smul.u32 8, %s26
        %p296 = scmp.lt.s32.totalorder %s25, 1
        %s297 = scalar_select %p296, %s25, 1
        %p298 = scmp.lt.s32.totalorder %s295, 15
        %s299 = scalar_select %p298, %s295, 15
        %s300 = smul.addr %s297, 16
        %s301 = sadd.s32 %s299, %s300
        %s302 = smul.addr %s301, 8
        %s303 = scalar_lea.vmem %s1, %s302
        %p304 = pneg %p84
        %p305 = pneg %p81
        %p306 = pneg %p105
        %p307 = pneg %p102
        %p308 = pneg %p126
        %p309 = pneg %p123
        %p310 = pneg %p147
        %p311 = pneg %p144
        %p312 = pneg %p168
        %p313 = pneg %p165
        %p314 = pneg %p189
        %p315 = pneg %p186
        %p316 = pneg %p217
        %p317 = pneg %p214
        %s318 = sand.u32 %s204, 1
        %s319 = scalar_lea.sflag [#allocation3], %s318
        %s320 = sand.u32 %s204, 1
        %s321 = smul.addr %s320, 32
        %s322 = scalar_lea.vmem [#allocation2], %s321
        %s323 = smul.u32 8, %s26
        %p324 = scmp.lt.s32.totalorder %s25, 1
        %s325 = scalar_select %p324, %s25, 1
        %p326 = scmp.lt.s32.totalorder %s323, 15
        %s327 = scalar_select %p326, %s323, 15
        %s328 = smul.addr %s325, 16
        %s329 = sadd.s32 %s327, %s328
        %s330 = smul.addr %s329, 8
        %s331 = scalar_lea.vmem %s0, %s330
        %s332 = smul.u32 8, %s26
        %s333 = smul.u32 8, %s26
        %p334 = scmp.lt.s32.totalorder %s25, 1
        %s335 = scalar_select %p334, %s25, 1
        %p336 = scmp.lt.s32.totalorder %s333, 15
        %s337 = scalar_select %p336, %s333, 15
        %s338 = smul.addr %s335, 16
        %s339 = sadd.s32 %s337, %s338
        %s340 = smul.addr %s339, 8
        %s341 = scalar_lea.vmem %s1, %s340
        %s342 = smul.u32 8, %s26
        %s343 = smul.u32 8, %s26
        %v345 = vld [vmem:[%s331] sm:$0xff]
        %v346 = vld [vmem:[%s331 + $0x8] sm:$0xff]
        %v347 = vld [vmem:[%s331 + $0x10] sm:$0xff]
        %v348 = vld [vmem:[%s331 + $0x18] sm:$0xff]
        %v349 = vld [vmem:[%s331 + $0x20] sm:$0xff]
        %v350 = vld [vmem:[%s331 + $0x28] sm:$0xff]
        %v351 = vld [vmem:[%s331 + $0x30] sm:$0xff]
        %v352 = vld [vmem:[%s331 + $0x38] sm:$0xff]
        %v353 = vld [vmem:[%s341] sm:$0xff]
        %v354 = vld [vmem:[%s341 + $0x8] sm:$0xff]
        %v355 = vld [vmem:[%s341 + $0x10] sm:$0xff]
        %v356 = vld [vmem:[%s341 + $0x18] sm:$0xff]
        %v357 = vld [vmem:[%s341 + $0x20] sm:$0xff]
        %v358 = vld [vmem:[%s341 + $0x28] sm:$0xff]
        %v359 = vld [vmem:[%s341 + $0x30] sm:$0xff]
        %v360 = vld [vmem:[%s341 + $0x38] sm:$0xff]
        %v361 = vld [vmem:[%s3] sm:$0x1]
        %v362 = vld [vmem:[%s4] sm:$0x1]
        %v363 = vld [vmem:[%s6] sm:$0x1]
        %vm364 = vcmask 523264
        %v365 = vsel %vm364, %v345, 0.0
        %366 = vadd.xlane.f32.xlu0 %v365
        %v367 = vpop.xlane.xlu0 %366
        %v368 = vsel %vm364, %v346, 0.0
        %369 = vadd.xlane.f32.xlu0 %v368
        %v370 = vpop.xlane.xlu0 %369
        %v371 = vsel %vm364, %v347, 0.0
        %372 = vadd.xlane.f32.xlu0 %v371
        %v373 = vpop.xlane.xlu0 %372
        %v374 = vsel %vm364, %v348, 0.0
        %375 = vadd.xlane.f32.xlu0 %v374
        %v376 = vpop.xlane.xlu0 %375
        %v377 = vsel %vm364, %v349, 0.0
        %378 = vadd.xlane.f32.xlu0 %v377
        %v379 = vpop.xlane.xlu0 %378
        %v380 = vsel %vm364, %v350, 0.0
        %381 = vadd.xlane.f32.xlu0 %v380
        %v382 = vpop.xlane.xlu0 %381
        %v383 = vsel %vm364, %v351, 0.0
        %384 = vadd.xlane.f32.xlu0 %v383
        %v385 = vpop.xlane.xlu0 %384
        %v386 = vsel %vm364, %v352, 0.0
        %387 = vadd.xlane.f32.xlu0 %v386
        %v388 = vpop.xlane.xlu0 %387
        %v389 = vmul.f32 %v367, 0.015625
        %v390 = vmul.f32 %v370, 0.015625
        %v391 = vmul.f32 %v373, 0.015625
        %v392 = vmul.f32 %v376, 0.015625
        %v393 = vmul.f32 %v379, 0.015625
        %v394 = vmul.f32 %v382, 0.015625
        %v395 = vmul.f32 %v385, 0.015625
        %v396 = vmul.f32 %v388, 0.015625
        %v397 = vmul.f32 %v345, %v345
        %v398 = vmul.f32 %v346, %v346
        %v399 = vmul.f32 %v347, %v347
        %v400 = vmul.f32 %v348, %v348
        %v401 = vmul.f32 %v349, %v349
        %v402 = vmul.f32 %v350, %v350
        %v403 = vmul.f32 %v351, %v351
        %v404 = vmul.f32 %v352, %v352
        %v405 = vsel %vm364, %v397, 0.0
        %406 = vadd.xlane.f32.xlu0 %v405
        %v407 = vpop.xlane.xlu0 %406
        %v408 = vsel %vm364, %v398, 0.0
        %409 = vadd.xlane.f32.xlu0 %v408
        %v410 = vpop.xlane.xlu0 %409
        %v411 = vsel %vm364, %v399, 0.0
        %412 = vadd.xlane.f32.xlu0 %v411
        %v413 = vpop.xlane.xlu0 %412
        %v414 = vsel %vm364, %v400, 0.0
        %415 = vadd.xlane.f32.xlu0 %v414
        %v416 = vpop.xlane.xlu0 %415
        %v417 = vsel %vm364, %v401, 0.0
        %418 = vadd.xlane.f32.xlu0 %v417
        %v419 = vpop.xlane.xlu0 %418
        %v420 = vsel %vm364, %v402, 0.0
        %421 = vadd.xlane.f32.xlu0 %v420
        %v422 = vpop.xlane.xlu0 %421
        %v423 = vsel %vm364, %v403, 0.0
        %424 = vadd.xlane.f32.xlu0 %v423
        %v425 = vpop.xlane.xlu0 %424
        %v426 = vsel %vm364, %v404, 0.0
        %427 = vadd.xlane.f32.xlu0 %v426
        %v428 = vpop.xlane.xlu0 %427
        %v429 = vmul.f32 %v407, 0.015625
        %v430 = vmul.f32 %v410, 0.015625
        %v431 = vmul.f32 %v413, 0.015625
        %v432 = vmul.f32 %v416, 0.015625
        %v433 = vmul.f32 %v419, 0.015625
        %v434 = vmul.f32 %v422, 0.015625
        %v435 = vmul.f32 %v425, 0.015625
        %v436 = vmul.f32 %v428, 0.015625
        %v437 = vsub.f32 %v345, %v389
        %v438 = vsub.f32 %v346, %v390
        %v439 = vsub.f32 %v347, %v391
        %v440 = vsub.f32 %v348, %v392
        %v441 = vsub.f32 %v349, %v393
        %v442 = vsub.f32 %v350, %v394
        %v443 = vsub.f32 %v351, %v395
        %v444 = vsub.f32 %v352, %v396
        %v445 = vmul.f32 %v389, %v389
        %v446 = vmul.f32 %v390, %v390
        %v447 = vmul.f32 %v391, %v391
        %v448 = vmul.f32 %v392, %v392
        %v449 = vmul.f32 %v393, %v393
        %v450 = vmul.f32 %v394, %v394
        %v451 = vmul.f32 %v395, %v395
        %v452 = vmul.f32 %v396, %v396
        %v453 = vsub.f32 %v429, %v445
        %v454 = vsub.f32 %v430, %v446
        %v455 = vsub.f32 %v431, %v447
        %v456 = vsub.f32 %v432, %v448
        %v457 = vsub.f32 %v433, %v449
        %v458 = vsub.f32 %v434, %v450
        %v459 = vsub.f32 %v435, %v451
        %v460 = vsub.f32 %v436, %v452
        %v461 = vadd.f32 %v453, 1e-05
        %v462 = vadd.f32 %v454, 1e-05
        %v463 = vadd.f32 %v455, 1e-05
        %v464 = vadd.f32 %v456, 1e-05
        %v465 = vadd.f32 %v457, 1e-05
        %v466 = vadd.f32 %v458, 1e-05
        %v467 = vadd.f32 %v459, 1e-05
        %v468 = vadd.f32 %v460, 1e-05
        %v469 = vrsqrt.pop %v461
        %v470 = vrsqrt.pop %v462
        %v471 = vrsqrt.pop %v463
        %v472 = vrsqrt.pop %v464
        %v473 = vrsqrt.pop %v465
        %v474 = vrsqrt.pop %v466
        %v475 = vrsqrt.pop %v467
        %v476 = vrsqrt.pop %v468
        %v477 = vmul.f32 %v437, %v469
        %v478 = vmul.f32 %v438, %v470
        %v479 = vmul.f32 %v439, %v471
        %v480 = vmul.f32 %v440, %v472
        %v481 = vmul.f32 %v441, %v473
        %v482 = vmul.f32 %v442, %v474
        %v483 = vmul.f32 %v443, %v475
        %v484 = vmul.f32 %v444, %v476
        %v485 = vpack.c.bf16 %v478, %v477
        %v486 = vpack.c.bf16 %v480, %v479
        %v487 = vpack.c.bf16 %v482, %v481
        %v488 = vpack.c.bf16 %v484, %v483
        %v489 = vld [vmem:[%s2] sm:$0xff]
        %v490 = vld [vmem:[%s2 + $0x8] sm:$0xff]
        %v491 = vld [vmem:[%s2 + $0x10] sm:$0xff]
        %v492 = vld [vmem:[%s2 + $0x18] sm:$0xff]
        %v493 = vld [vmem:[%s2 + $0x20] sm:$0xff]
        %v494 = vld [vmem:[%s2 + $0x28] sm:$0xff]
        %v495 = vld [vmem:[%s2 + $0x30] sm:$0xff]
        %v496 = vld [vmem:[%s2 + $0x38] sm:$0xff]
        %v505 = vunpack.c.l.b16 %v489
        %v506 = vunpack.c.h.b16 %v489
        %v507 = vunpack.c.l.b16 %v490
        %v508 = vunpack.c.h.b16 %v490
        %v509 = vunpack.c.l.b16 %v491
        %v510 = vunpack.c.h.b16 %v491
        %v511 = vunpack.c.l.b16 %v492
        %v512 = vunpack.c.h.b16 %v492
        %v513 = vunpack.c.l.b16 %v493
        %v514 = vunpack.c.h.b16 %v493
        %v515 = vunpack.c.l.b16 %v494
        %v516 = vunpack.c.h.b16 %v494
        %v517 = vunpack.c.l.b16 %v495
        %v518 = vunpack.c.h.b16 %v495
        %v519 = vunpack.c.l.b16 %v496
        %v520 = vunpack.c.h.b16 %v496
        %v521 = vpack.c.b16 %v507, %v505
        %v522 = vpack.c.b16 %v508, %v506
        %v523 = vpack.c.b16 %v511, %v509
        %v524 = vpack.c.b16 %v512, %v510
        %v525 = vpack.c.b16 %v515, %v513
        %v526 = vpack.c.b16 %v516, %v514
        %v527 = vpack.c.b16 %v519, %v517
        %v528 = vpack.c.b16 %v520, %v518
        %v538 = vsel %vm364, %v485, 0
        %v541 = vsel %vm364, %v486, 0
        %v544 = vsel %vm364, %v487, 0
        %v547 = vsel %vm364, %v488, 0
        %549 = vmatprep.subr.bf16.mxu0 %v522
        %550 = vmatpush1.bf16.msra.mxu0 %v521
        %551 = vmatprep.subr.bf16.mxu0 %v524
        %552 = vmatpush1.bf16.msra.mxu0 %v523
        %553 = vmatprep.subr.bf16.mxu0 %v526
        %554 = vmatpush1.bf16.msra.mxu0 %v525
        %555 = vmatprep.subr.bf16.mxu0 %v528
        %556 = vmatpush1.bf16.msra.mxu0 %v527
        %557 = vmatprep.subr.bf16.mxu0 0
        %558 = vmatpush1.bf16.msra.mxu0 0
        %559 = vmatprep.subr.bf16.mxu0 0
        %560 = vmatpush1.bf16.msra.mxu0 0
        %561 = vmatprep.subr.bf16.mxu0 0
        %562 = vmatpush1.bf16.msra.mxu0 0
        %563 = vmatprep.subr.bf16.mxu0 0
        %564 = vmatpush1.bf16.msra.mxu0 0
        %565 = vmatprep.subr.bf16.mxu0 0
        %566 = vmatpush1.bf16.msra.mxu0 0
        %567 = vmatprep.subr.bf16.mxu0 0
        %568 = vmatpush1.bf16.msra.mxu0 0
        %569 = vmatprep.subr.bf16.mxu0 0
        %570 = vmatpush1.bf16.msra.mxu0 0
        %571 = vmatprep.subr.bf16.mxu0 0
        %572 = vmatpush1.bf16.msra.mxu0 0
        %573 = vmatprep.subr.bf16.mxu0 0
        %574 = vmatpush1.bf16.msra.mxu0 0
        %575 = vmatprep.subr.bf16.mxu0 0
        %576 = vmatpush1.bf16.msra.mxu0 0
        %577 = vmatprep.subr.bf16.mxu0 0
        %578 = vmatpush1.bf16.msra.mxu0 0
        %579 = vmatprep.subr.bf16.mxu0 0
        %580 = vmatpush1.bf16.msra.mxu0 0
        %581 = vmatprep.mubr.bf16.mxu0 0
        %582 = vmatmul.mubr.bf16.gmra.mrb[0].mxu0 %v538
        %v583 = vpop.f32.mrb[0].mxu0
        %v584 = vadd.f32 0.0, %v583
        %v585 = vpop.f32.mrb[0].mxu0
        %v586 = vadd.f32 0.0, %v585
        %v587 = vpop.f32.mrb[0].mxu0
        %v588 = vadd.f32 0.0, %v587
        %v589 = vpop.f32.mrb[0].mxu0
        %v590 = vadd.f32 0.0, %v589
        %591 = vmatprep.mubr.bf16.mxu0 0
        %592 = vmatmul.mubr.bf16.gmra.mrb[0].mxu0 %v541
        %v593 = vpop.f32.mrb[0].mxu0
        %v594 = vadd.f32 0.0, %v593
        %v595 = vpop.f32.mrb[0].mxu0
        %v596 = vadd.f32 0.0, %v595
        %v597 = vpop.f32.mrb[0].mxu0
        %v598 = vadd.f32 0.0, %v597
        %v599 = vpop.f32.mrb[0].mxu0
        %v600 = vadd.f32 0.0, %v599
        %601 = vmatprep.mubr.bf16.mxu0 0
        %602 = vmatmul.mubr.bf16.gmra.mrb[0].mxu0 %v544
        %v603 = vpop.f32.mrb[0].mxu0
        %v604 = vadd.f32 0.0, %v603
        %v605 = vpop.f32.mrb[0].mxu0
        %v606 = vadd.f32 0.0, %v605
        %v607 = vpop.f32.mrb[0].mxu0
        %v608 = vadd.f32 0.0, %v607
        %v609 = vpop.f32.mrb[0].mxu0
        %v610 = vadd.f32 0.0, %v609
        %611 = vmatprep.mubr.bf16.mxu0 0
        %612 = vmatmul.mubr.bf16.gmra.mrb[0].mxu0 %v547
        %v613 = vpop.f32.mrb[0].mxu0
        %v614 = vadd.f32 0.0, %v613
        %v615 = vpop.f32.mrb[0].mxu0
        %v616 = vadd.f32 0.0, %v615
        %v617 = vpop.f32.mrb[0].mxu0
        %v618 = vadd.f32 0.0, %v617
        %v619 = vpop.f32.mrb[0].mxu0
        %v620 = vadd.f32 0.0, %v619
        %621 = vdwg.mxu0
        %623 = vset.pattern.permute.xlu0 0
        %624 = vperm.xlu0 %623, %v353
        %v625 = vpop.permute.xlu0 %624
        %628 = vset.pattern.permute.xlu0 0
        %629 = vperm.xlu0 %628, %v354
        %v630 = vpop.permute.xlu0 %629
        %633 = vset.pattern.permute.xlu0 0
        %634 = vperm.xlu0 %633, %v355
        %v635 = vpop.permute.xlu0 %634
        %638 = vset.pattern.permute.xlu0 0
        %639 = vperm.xlu0 %638, %v356
        %v640 = vpop.permute.xlu0 %639
        %643 = vset.pattern.permute.xlu0 0
        %644 = vperm.xlu0 %643, %v357
        %v645 = vpop.permute.xlu0 %644
        %648 = vset.pattern.permute.xlu0 0
        %649 = vperm.xlu0 %648, %v358
        %v650 = vpop.permute.xlu0 %649
        %653 = vset.pattern.permute.xlu0 0
        %654 = vperm.xlu0 %653, %v359
        %v655 = vpop.permute.xlu0 %654
        %658 = vset.pattern.permute.xlu0 0
        %659 = vperm.xlu0 %658, %v360
        %v660 = vpop.permute.xlu0 %659
        %v663 = vlaneseq
        %v664 = vshrl.u32 %v663, 7
        %v665 = vsub.s32 0, %v664
        %v666 = vrot.slane %v361, %v665
        %v668 = vmul.f32 %v625, %v666
        %v669 = vmul.f32 %v630, %v666
        %v670 = vmul.f32 %v635, %v666
        %v671 = vmul.f32 %v640, %v666
        %v672 = vmul.f32 %v645, %v666
        %v673 = vmul.f32 %v650, %v666
        %v674 = vmul.f32 %v655, %v666
        %v675 = vmul.f32 %v660, %v666
        %v676 = vadd.f32 %v584, %v668
        %v677 = vadd.f32 %v588, %v669
        %v678 = vadd.f32 %v594, %v670
        %v679 = vadd.f32 %v598, %v671
        %v680 = vadd.f32 %v604, %v672
        %v681 = vadd.f32 %v608, %v673
        %v682 = vadd.f32 %v614, %v674
        %v683 = vadd.f32 %v618, %v675
        %v685 = vlaneseq
        %v686 = vshrl.u32 %v685, 7
        %v687 = vsub.s32 0, %v686
        %v688 = vrot.slane %v362, %v687
        %v690 = vadd.f32 %v676, %v688
        %v691 = vadd.f32 %v677, %v688
        %v692 = vadd.f32 %v678, %v688
        %v693 = vadd.f32 %v679, %v688
        %v694 = vadd.f32 %v680, %v688
        %v695 = vadd.f32 %v681, %v688
        %v696 = vadd.f32 %v682, %v688
        %v697 = vadd.f32 %v683, %v688
        %v698 = vtanh.pop %v690
        %v699 = vtanh.pop %v691
        %v700 = vtanh.pop %v692
        %v701 = vtanh.pop %v693
        %v702 = vtanh.pop %v694
        %v703 = vtanh.pop %v695
        %v704 = vtanh.pop %v696
        %v705 = vtanh.pop %v697
        %706 = vadd.xlane.f32.xlu0 %v698
        %v707 = vpop.xlane.xlu0 %706
        %708 = vadd.xlane.f32.xlu0 %v699
        %v709 = vpop.xlane.xlu0 %708
        %710 = vadd.xlane.f32.xlu0 %v700
        %v711 = vpop.xlane.xlu0 %710
        %712 = vadd.xlane.f32.xlu0 %v701
        %v713 = vpop.xlane.xlu0 %712
        %714 = vadd.xlane.f32.xlu0 %v702
        %v715 = vpop.xlane.xlu0 %714
        %716 = vadd.xlane.f32.xlu0 %v703
        %v717 = vpop.xlane.xlu0 %716
        %718 = vadd.xlane.f32.xlu0 %v704
        %v719 = vpop.xlane.xlu0 %718
        %720 = vadd.xlane.f32.xlu0 %v705
        %v721 = vpop.xlane.xlu0 %720
        %v722 = vmul.f32 %v707, 0.015384615
        %v723 = vmul.f32 %v709, 0.015384615
        %v724 = vmul.f32 %v711, 0.015384615
        %v725 = vmul.f32 %v713, 0.015384615
        %v726 = vmul.f32 %v715, 0.015384615
        %v727 = vmul.f32 %v717, 0.015384615
        %v728 = vmul.f32 %v719, 0.015384615
        %v729 = vmul.f32 %v721, 0.015384615
        %v730 = vmul.f32 %v698, %v698
        %v731 = vmul.f32 %v699, %v699
        %v732 = vmul.f32 %v700, %v700
        %v733 = vmul.f32 %v701, %v701
        %v734 = vmul.f32 %v702, %v702
        %v735 = vmul.f32 %v703, %v703
        %v736 = vmul.f32 %v704, %v704
        %v737 = vmul.f32 %v705, %v705
        %738 = vadd.xlane.f32.xlu0 %v730
        %v739 = vpop.xlane.xlu0 %738
        %740 = vadd.xlane.f32.xlu0 %v731
        %v741 = vpop.xlane.xlu0 %740
        %742 = vadd.xlane.f32.xlu0 %v732
        %v743 = vpop.xlane.xlu0 %742
        %744 = vadd.xlane.f32.xlu0 %v733
        %v745 = vpop.xlane.xlu0 %744
        %746 = vadd.xlane.f32.xlu0 %v734
        %v747 = vpop.xlane.xlu0 %746
        %748 = vadd.xlane.f32.xlu0 %v735
        %v749 = vpop.xlane.xlu0 %748
        %750 = vadd.xlane.f32.xlu0 %v736
        %v751 = vpop.xlane.xlu0 %750
        %752 = vadd.xlane.f32.xlu0 %v737
        %v753 = vpop.xlane.xlu0 %752
        %v754 = vmul.f32 %v739, 0.015384615
        %v755 = vmul.f32 %v741, 0.015384615
        %v756 = vmul.f32 %v743, 0.015384615
        %v757 = vmul.f32 %v745, 0.015384615
        %v758 = vmul.f32 %v747, 0.015384615
        %v759 = vmul.f32 %v749, 0.015384615
        %v760 = vmul.f32 %v751, 0.015384615
        %v761 = vmul.f32 %v753, 0.015384615
        %v762 = vsub.f32 %v698, %v722
        %v763 = vsub.f32 %v699, %v723
        %v764 = vsub.f32 %v700, %v724
        %v765 = vsub.f32 %v701, %v725
        %v766 = vsub.f32 %v702, %v726
        %v767 = vsub.f32 %v703, %v727
        %v768 = vsub.f32 %v704, %v728
        %v769 = vsub.f32 %v705, %v729
        %v770 = vmul.f32 %v722, %v722
        %v771 = vmul.f32 %v723, %v723
        %v772 = vmul.f32 %v724, %v724
        %v773 = vmul.f32 %v725, %v725
        %v774 = vmul.f32 %v726, %v726
        %v775 = vmul.f32 %v727, %v727
        %v776 = vmul.f32 %v728, %v728
        %v777 = vmul.f32 %v729, %v729
        %v778 = vsub.f32 %v754, %v770
        %v779 = vsub.f32 %v755, %v771
        %v780 = vsub.f32 %v756, %v772
        %v781 = vsub.f32 %v757, %v773
        %v782 = vsub.f32 %v758, %v774
        %v783 = vsub.f32 %v759, %v775
        %v784 = vsub.f32 %v760, %v776
        %v785 = vsub.f32 %v761, %v777
        %v786 = vadd.f32 %v778, 1e-05
        %v787 = vadd.f32 %v779, 1e-05
        %v788 = vadd.f32 %v780, 1e-05
        %v789 = vadd.f32 %v781, 1e-05
        %v790 = vadd.f32 %v782, 1e-05
        %v791 = vadd.f32 %v783, 1e-05
        %v792 = vadd.f32 %v784, 1e-05
        %v793 = vadd.f32 %v785, 1e-05
        %v794 = vrsqrt.pop %v786
        %v795 = vrsqrt.pop %v787
        %v796 = vrsqrt.pop %v788
        %v797 = vrsqrt.pop %v789
        %v798 = vrsqrt.pop %v790
        %v799 = vrsqrt.pop %v791
        %v800 = vrsqrt.pop %v792
        %v801 = vrsqrt.pop %v793
        %v802 = vmul.f32 %v762, %v794
        %v803 = vmul.f32 %v763, %v795
        %v804 = vmul.f32 %v764, %v796
        %v805 = vmul.f32 %v765, %v797
        %v806 = vmul.f32 %v766, %v798
        %v807 = vmul.f32 %v767, %v799
        %v808 = vmul.f32 %v768, %v800
        %v809 = vmul.f32 %v769, %v801
        %v810 = vpack.c.bf16 %v803, %v802
        %v811 = vpack.c.bf16 %v805, %v804
        %v812 = vpack.c.bf16 %v807, %v806
        %v813 = vpack.c.bf16 %v809, %v808
        %v814 = vld [vmem:[%s5] sm:$0xf]
        %v815 = vld [vmem:[%s5 + $0x4] sm:$0xf]
        %v816 = vld [vmem:[%s5 + $0x8] sm:$0xf]
        %v817 = vld [vmem:[%s5 + $0xc] sm:$0xf]
        %v818 = vld [vmem:[%s5 + $0x10] sm:$0xf]
        %v819 = vld [vmem:[%s5 + $0x14] sm:$0xf]
        %v820 = vld [vmem:[%s5 + $0x18] sm:$0xf]
        %v821 = vld [vmem:[%s5 + $0x1c] sm:$0xf]
        %v822 = vld [vmem:[%s5 + $0x20] sm:$0xf]
        %v823 = vld [vmem:[%s5 + $0x24] sm:$0xf]
        %v824 = vld [vmem:[%s5 + $0x28] sm:$0xf]
        %v825 = vld [vmem:[%s5 + $0x2c] sm:$0xf]
        %v826 = vld [vmem:[%s5 + $0x30] sm:$0xf]
        %v827 = vld [vmem:[%s5 + $0x34] sm:$0xf]
        %v828 = vld [vmem:[%s5 + $0x38] sm:$0xf]
        %v829 = vld [vmem:[%s5 + $0x3c] sm:$0xf]
        %v846 = vunpack.c.l.b16 %v814
        %v847 = vunpack.c.l.b16 %v815
        %v848 = vunpack.c.l.b16 %v816
        %v849 = vunpack.c.l.b16 %v817
        %v850 = vunpack.c.l.b16 %v818
        %v851 = vunpack.c.l.b16 %v819
        %v852 = vunpack.c.l.b16 %v820
        %v853 = vunpack.c.l.b16 %v821
        %v854 = vunpack.c.l.b16 %v822
        %v855 = vunpack.c.l.b16 %v823
        %v856 = vunpack.c.l.b16 %v824
        %v857 = vunpack.c.l.b16 %v825
        %v858 = vunpack.c.l.b16 %v826
        %v859 = vunpack.c.l.b16 %v827
        %v860 = vunpack.c.l.b16 %v828
        %v861 = vunpack.c.l.b16 %v829
        %v862 = vpack.c.b16 %v847, %v846
        %v863 = vpack.c.b16 %v849, %v848
        %v864 = vpack.c.b16 %v851, %v850
        %v865 = vpack.c.b16 %v853, %v852
        %v866 = vpack.c.b16 %v855, %v854
        %v867 = vpack.c.b16 %v857, %v856
        %v868 = vpack.c.b16 %v859, %v858
        %v869 = vpack.c.b16 %v861, %v860
        %878 = vmatprep.subr.bf16.mxu0 0
        %879 = vmatpush1.bf16.msra.mxu0 %v862
        %880 = vmatprep.subr.bf16.mxu0 0
        %881 = vmatpush1.bf16.msra.mxu0 %v863
        %882 = vmatprep.subr.bf16.mxu0 0
        %883 = vmatpush1.bf16.msra.mxu0 %v864
        %884 = vmatprep.subr.bf16.mxu0 0
        %885 = vmatpush1.bf16.msra.mxu0 %v865
        %886 = vmatprep.subr.bf16.mxu0 0
        %887 = vmatpush1.bf16.msra.mxu0 %v866
        %888 = vmatprep.subr.bf16.mxu0 0
        %889 = vmatpush1.bf16.msra.mxu0 %v867
        %890 = vmatprep.subr.bf16.mxu0 0
        %891 = vmatpush1.bf16.msra.mxu0 %v868
        %892 = vmatprep.subr.bf16.mxu0 0
        %893 = vmatpush1.bf16.msra.mxu0 %v869
        %894 = vmatprep.subr.bf16.mxu0 0
        %895 = vmatpush1.bf16.msra.mxu0 0
        %896 = vmatprep.subr.bf16.mxu0 0
        %897 = vmatpush1.bf16.msra.mxu0 0
        %898 = vmatprep.subr.bf16.mxu0 0
        %899 = vmatpush1.bf16.msra.mxu0 0
        %900 = vmatprep.subr.bf16.mxu0 0
        %901 = vmatpush1.bf16.msra.mxu0 0
        %902 = vmatprep.subr.bf16.mxu0 0
        %903 = vmatpush1.bf16.msra.mxu0 0
        %904 = vmatprep.subr.bf16.mxu0 0
        %905 = vmatpush1.bf16.msra.mxu0 0
        %906 = vmatprep.subr.bf16.mxu0 0
        %907 = vmatpush1.bf16.msra.mxu0 0
        %908 = vmatprep.subr.bf16.mxu0 0
        %909 = vmatpush1.bf16.msra.mxu0 0
        %910 = vmatprep.mubr.bf16.mxu0 0
        %911 = vmatmul.mubr.bf16.gmra.mrb[0].mxu0 %v810
        %v912 = vpop.f32.mrb[0].mxu0
        %v913 = vadd.f32 0.0, %v912
        %v914 = vpop.f32.mrb[0].mxu0
        %v915 = vpop.f32.mrb[0].mxu0
        %v916 = vadd.f32 0.0, %v915
        %v917 = vpop.f32.mrb[0].mxu0
        %918 = vmatprep.mubr.bf16.mxu0 0
        %919 = vmatmul.mubr.bf16.gmra.mrb[0].mxu0 %v811
        %v920 = vpop.f32.mrb[0].mxu0
        %v921 = vadd.f32 0.0, %v920
        %v922 = vpop.f32.mrb[0].mxu0
        %v923 = vpop.f32.mrb[0].mxu0
        %v924 = vadd.f32 0.0, %v923
        %v925 = vpop.f32.mrb[0].mxu0
        %926 = vmatprep.mubr.bf16.mxu0 0
        %927 = vmatmul.mubr.bf16.gmra.mrb[0].mxu0 %v812
        %v928 = vpop.f32.mrb[0].mxu0
        %v929 = vadd.f32 0.0, %v928
        %v930 = vpop.f32.mrb[0].mxu0
        %v931 = vpop.f32.mrb[0].mxu0
        %v932 = vadd.f32 0.0, %v931
        %v933 = vpop.f32.mrb[0].mxu0
        %934 = vmatprep.mubr.bf16.mxu0 0
        %935 = vmatmul.mubr.bf16.gmra.mrb[0].mxu0 %v813
        %v936 = vpop.f32.mrb[0].mxu0
        %v937 = vadd.f32 0.0, %v936
        %v938 = vpop.f32.mrb[0].mxu0
        %v939 = vpop.f32.mrb[0].mxu0
        %v940 = vadd.f32 0.0, %v939
        %v941 = vpop.f32.mrb[0].mxu0
        %942 = vdwg.mxu0
        %v943 = vadd.f32 %v586, %v913
        %v944 = vadd.f32 %v590, %v916
        %v945 = vadd.f32 %v596, %v921
        %v946 = vadd.f32 %v600, %v924
        %v947 = vadd.f32 %v606, %v929
        %v948 = vadd.f32 %v610, %v932
        %v949 = vadd.f32 %v616, %v937
        %v950 = vadd.f32 %v620, %v940
        %v952 = vlaneseq
        %v953 = vshrl.u32 %v952, 7
        %v954 = vsub.s32 0, %v953
        %v955 = vrot.slane %v363, %v954
        %v957 = vadd.f32 %v943, %v955
        %v958 = vadd.f32 %v944, %v955
        %v959 = vadd.f32 %v945, %v955
        %v960 = vadd.f32 %v946, %v955
        %v961 = vadd.f32 %v947, %v955
        %v962 = vadd.f32 %v948, %v955
        %v963 = vadd.f32 %v949, %v955
        %v964 = vadd.f32 %v950, %v955
        %v965 = vpack.c.bf16 %v958, %v957
        %v966 = vpack.c.bf16 %v960, %v959
        %v967 = vpack.c.bf16 %v962, %v961
        %v968 = vpack.c.bf16 %v964, %v963
        %v973 = vunpack.c.l.b16 %v965
        %v974 = vunpack.c.h.b16 %v965
        %v975 = vunpack.c.l.b16 %v966
        %v976 = vunpack.c.h.b16 %v966
        %v977 = vunpack.c.l.b16 %v967
        %v978 = vunpack.c.h.b16 %v967
        %v979 = vunpack.c.l.b16 %v968
        %v980 = vunpack.c.h.b16 %v968
        %v981 = vpack.c.b16 %v973, %v973
        %v982 = vpack.c.b16 %v974, %v974
        %v983 = vpack.c.b16 %v975, %v975
        %v984 = vpack.c.b16 %v976, %v976
        %v985 = vpack.c.b16 %v977, %v977
        %v986 = vpack.c.b16 %v978, %v978
        %v987 = vpack.c.b16 %v979, %v979
        %v988 = vpack.c.b16 %v980, %v980
        %997 = vst [vmem:[%s322] sm:$0xf] %v981
        %998 = vst [vmem:[%s322 + $0x4] sm:$0xf] %v982
        %999 = vst [vmem:[%s322 + $0x8] sm:$0xf] %v983
        %1000 = vst [vmem:[%s322 + $0xc] sm:$0xf] %v984
        %1001 = vst [vmem:[%s322 + $0x10] sm:$0xf] %v985
        %1002 = vst [vmem:[%s322 + $0x14] sm:$0xf] %v986
        %1003 = vst [vmem:[%s322 + $0x18] sm:$0xf] %v987
        %1004 = vst [vmem:[%s322 + $0x1c] sm:$0xf] %v988
        %s1005 = sand.u32 %s204, 1
        %s1006 = scalar_lea.sflag [#allocation3], %s1005
        %s1007 = sand.u32 %s204, 1
        %s1008 = smul.addr %s1007, 32
        %s1009 = scalar_lea.vmem [#allocation2], %s1008
        // Predicated region
        $region49: #{tpu_custom_call.1} parent=47 // pred_check
          %p1010 = pneg %p214
        $region50: #{tpu_custom_call.1} parent=47 // pred_check_branch
          %1012 = sbr.rel (%p1010) target = $region52
        $region51: #{tpu_custom_call.1} parent=47 // pred_region
          %s1013 = smul.u32 8, %s26
          %s1015 = ssub.s32 512, 512
          %1016 = vsyncadd %s1006, %s1015
          %s1017 = smul.addr %s25, 16
          %s1018 = sadd.s32 %s1013, %s1017
          %s1019 = smul.addr %s1018, 64
          %s1020 = scalar_lea.hbm %s7, %s1019
          %s1021 = sshll.u32 %s1009, 4
          %s1022 = int_to_ptr.vmem [resolvable:$true] %s1021
          %1027 = dma.vmem_to_hbm [thread:$0]  %s1022, 512, %s1020, %s1006, 64, 64, 4
        $region52: #{tpu_custom_call.1} parent=47 // pred_fallthru
          _
      $region48: #{tpu_custom_call.1} parent=5 // pred_fallthru
        _
      %p1028 = scmp.le.s32.totalorder 2, %s16
      // Predicated region
      $region53: #{tpu_custom_call.1} parent=5 // pred_check
        %p1029 = pneg %p1028
      $region54: #{tpu_custom_call.1} parent=5 // pred_check_branch
        %1031 = sbr.rel (%p1029) target = $region56
      $region55: #{tpu_custom_call.1} parent=5 // pred_region
        %s1032 = ssub.s32 %s16, 2
        // Predicated region
        $region57: #{tpu_custom_call.1} parent=55 // pred_check
          %p1033 = pneg %p220
        $region58: #{tpu_custom_call.1} parent=55 // pred_check_branch
          %1035 = sbr.rel (%p1033) target = $region60
        $region59: #{tpu_custom_call.1} parent=55 // pred_region
          %s1036 = sand.u32 %s205, 1
          %s1037 = scalar_lea.sflag [#allocation3], %s1036
          %s1038 = sand.u32 %s205, 1
          %s1039 = smul.addr %s1038, 32
          %s1040 = scalar_lea.vmem [#allocation2], %s1039
          %1041 = dma.done %s1037, 512
        $region60: #{tpu_custom_call.1} parent=55 // pred_fallthru
          _
      $region56: #{tpu_custom_call.1} parent=5 // pred_fallthru
        _
    $region6: #{tpu_custom_call.1} parent=1 // loop_footer
      %s20 = sadd.s32 1, %s16
    $region7: #{tpu_custom_call.1} parent=1 // loop_footer_branch
      %15 = sbr.rel target = $region3
    $region8: #{tpu_custom_call.1} parent=1 // loop_exit
      _
    %1042 = vsyncpa [#allocation3], 1
    %s1043 = scalar_lea.sflag [#allocation3], 1
    %1044 = vsyncpa %s1043, 1

</llo_original>
